<compile_context>
chip_gen: v5e
topology: v5e:2x2
jax: 0.10.0
libtpu: 0.0.40
codegen_flags: <defaults>
</compile_context>

<pallas_src>
import functools
import random

import jax
import jax.numpy as jnp
from jax.experimental import pallas as pl
from jax.experimental.pallas import tpu as pltpu

SCALING = 1.5
DISTINCT = 6
WINDOW_SIZE = 100.0


def _random_groups_kernel(x_ref, out_ref, *, ngroups, inv_ngroups, window_size):
    """One batch tile.

    x_ref   : [B_blk, T, F] float VMEM ref (feature 0 holds the timestamps)
    out_ref : [B_blk, G, T] bool VMEM ref
    """
    # Fused feature-0 slice (F is tiny, e.g. 3).
    x = x_ref[...]                                   # [B_blk, T, F]
    t = x[:, :, 0].astype(jnp.float32)               # [B_blk, T], T on lanes

    # Per-batch-row reductions over time (lane axis -> XLU slot, cheap).
    t_lower = jnp.min(t, axis=1, keepdims=True)      # [B_blk, 1]
    t_upper = jnp.max(t, axis=1, keepdims=True)      # [B_blk, 1]
    step_size = (t_upper - t_lower) * inv_ngroups    # [B_blk, 1]

    # Static unroll over groups (ngroups <= 9).  Each iteration is a
    # lane-dense [B_blk, T] compare and store; no [B_blk, G, T] intermediate.
    for g in range(ngroups):
        time_start = t_lower + step_size * float(g)                 # [B_blk, 1]
        time_end = jnp.minimum(time_start + window_size, t_upper)   # [B_blk, 1]
        mask_g = (time_start <= t) & (time_end >= t)                # [B_blk, T] bool
        out_ref[:, g, :] = mask_g


def random_groups_forward(past_time_features, *, ngroups, window_size=WINDOW_SIZE):
    """JAX wrapper matching RandomGroups.forward (ngroups chosen by caller)."""
    B, T, F = past_time_features.shape
    b_blk = min(B, 8)                     # >= 8 keeps the sublane axis filled
    grid = (pl.cdiv(B, b_blk),)

    kernel = functools.partial(
        _random_groups_kernel,
        ngroups=int(ngroups),
        inv_ngroups=1.0 / float(ngroups),
        window_size=float(window_size),
    )

    return pl.pallas_call(
        kernel,
        out_shape=jax.ShapeDtypeStruct((B, ngroups, T), jnp.bool_),
        grid=grid,
        in_specs=[
            # Full (T, F) plane per block (last two dims = full array dims);
            # feature 0 is selected inside the kernel.
            pl.BlockSpec((b_blk, T, F), lambda b: (b, 0, 0)),
        ],
        out_specs=pl.BlockSpec((b_blk, ngroups, T), lambda b: (b, 0, 0)),
        compiler_params=pltpu.CompilerParams(
            dimension_semantics=("parallel",),   # shard batch across TCs on v7x
        ),
    )(past_time_features)


if __name__ == "__main__":
    # Deterministic example inputs (small shapes; T a multiple of 128 so the
    # lane axis is dense).
    key = jax.random.PRNGKey(0)
    B, T, F = 16, 128, 3

    base = jnp.arange(T, dtype=jnp.float32)[None, :, None] * 25.0      # [1, T, 1]
    noise = jax.random.uniform(key, (B, T, F), dtype=jnp.float32) * 5.0
    past_time_features = base + noise                                   # [B, T, F]

    # ngroups = random.randint(1, scaling * distinct), seeded deterministically.
    rng = random.Random(0)
    max_group = SCALING * DISTINCT
    ngroups = rng.randint(1, int(max_group))

    out = random_groups_forward(past_time_features, ngroups=ngroups)
    out = jax.block_until_ready(out)

    assert out.shape == (B, ngroups, T), out.shape
    assert out.dtype == jnp.bool_, out.dtype

    # Pure-JAX reference (same formulation as the kernel).
    t = past_time_features[:, :, 0].astype(jnp.float32)
    t_lower = t.min(axis=1, keepdims=True)
    t_upper = t.max(axis=1, keepdims=True)
    step = (t_upper - t_lower) * (1.0 / float(ngroups))
    starts = t_lower + jnp.arange(ngroups, dtype=jnp.float32)[None, :] * step
    ends = jnp.minimum(starts + WINDOW_SIZE, t_upper)
    ref = (starts[:, :, None] <= t[:, None, :]) & (ends[:, :, None] >= t[:, None, :])
    assert bool(jnp.array_equal(out, ref)), "kernel output mismatch vs reference"

    print("KERNEL_OK")
</pallas_src>

<mosaic_0001>
module attributes {stable_mosaic.version = 11 : i64} {
  func.func @_random_groups_kernel(%arg0: i32, %arg1: memref<8x128x3xf32, #tpu.memory_space<vmem>>, %arg2: memref<8x7x128xi32, #tpu.memory_space<vmem>>) attributes {dimension_semantics = [#tpu.dimension_semantics<parallel>], iteration_bounds = array<i64: 2>, scalar_prefetch = 0 : i64, scratch_operands = 0 : i64, tpu.core_type = #tpu.core_type<tc>, window_params = [{transform_indices = @transform_0, window_bounds = array<i64: 8, 128, 3>}, {transform_indices = @transform_1, window_bounds = array<i64: 8, 7, 128>}]} {
    %c0 = arith.constant 0 : index
    %c0_0 = arith.constant 0 : index
    %c0_1 = arith.constant 0 : index
    %0 = vector.load %arg1[%c0, %c0_0, %c0_1] : memref<8x128x3xf32, #tpu.memory_space<vmem>>, vector<8x128x3xf32>
    %1 = vector.extract_strided_slice %0 {offsets = [0, 0, 0], sizes = [8, 128, 1], strides = [1, 1, 1]} : vector<8x128x3xf32> to vector<8x128x1xf32>
    %2 = vector.shape_cast %1 : vector<8x128x1xf32> to vector<8x128xf32>
    %cst = arith.constant dense<0x7F800000> : vector<8xf32>
    %3 = vector.multi_reduction <minimumf>, %2, %cst [1] : vector<8x128xf32> to vector<8xf32>
    %4 = vector.shape_cast %3 : vector<8xf32> to vector<8x1xf32>
    %cst_2 = arith.constant dense<0xFF800000> : vector<8xf32>
    %5 = vector.multi_reduction <maximumf>, %2, %cst_2 [1] : vector<8x128xf32> to vector<8xf32>
    %6 = vector.shape_cast %5 : vector<8xf32> to vector<8x1xf32>
    %7 = arith.subf %6, %4 : vector<8x1xf32>
    %cst_3 = arith.constant 0.142857149 : f32
    %8 = vector.broadcast %cst_3 : f32 to vector<8x1xf32>
    %9 = arith.mulf %7, %8 : vector<8x1xf32>
    %cst_4 = arith.constant 0.000000e+00 : f32
    %10 = vector.broadcast %cst_4 : f32 to vector<8x1xf32>
    %11 = arith.mulf %9, %10 : vector<8x1xf32>
    %12 = arith.addf %4, %11 : vector<8x1xf32>
    %cst_5 = arith.constant 1.000000e+02 : f32
    %13 = vector.broadcast %cst_5 : f32 to vector<8x1xf32>
    %14 = arith.addf %12, %13 : vector<8x1xf32>
    %15 = arith.minimumf %14, %6 : vector<8x1xf32>
    %16 = vector.broadcast %12 : vector<8x1xf32> to vector<8x128xf32>
    %17 = arith.cmpf ole, %16, %2 : vector<8x128xf32>
    %18 = vector.broadcast %15 : vector<8x1xf32> to vector<8x128xf32>
    %19 = arith.cmpf oge, %18, %2 : vector<8x128xf32>
    %20 = arith.andi %17, %19 : vector<8x128xi1>
    %c0_6 = arith.constant 0 : index
    %c0_7 = arith.constant 0 : index
    %c0_8 = arith.constant 0 : index
    %21 = vector.load %arg2[%c0_6, %c0_7, %c0_8] : memref<8x7x128xi32, #tpu.memory_space<vmem>>, vector<8x1x128xi32>
    %22 = arith.extui %20 : vector<8x128xi1> to vector<8x128xi32>
    %23 = vector.shape_cast %21 : vector<8x1x128xi32> to vector<8x128xi32>
    %24 = vector.shape_cast %22 : vector<8x128xi32> to vector<8x1x128xi32>
    %cst_9 = arith.constant dense<0> : vector<8x128xi32>
    %25 = arith.cmpi ne, %23, %cst_9 : vector<8x128xi32>
    tpu.vector_store %arg2[%c0_6, %c0_7, %c0_8], %24 {strides = array<i32>} : memref<8x7x128xi32, #tpu.memory_space<vmem>>, vector<8x1x128xi32>,
    %cst_10 = arith.constant 1.000000e+00 : f32
    %26 = vector.broadcast %cst_10 : f32 to vector<8x1xf32>
    %27 = arith.mulf %9, %26 : vector<8x1xf32>
    %28 = arith.addf %4, %27 : vector<8x1xf32>
    %cst_11 = arith.constant 1.000000e+02 : f32
    %29 = vector.broadcast %cst_11 : f32 to vector<8x1xf32>
    %30 = arith.addf %28, %29 : vector<8x1xf32>
    %31 = arith.minimumf %30, %6 : vector<8x1xf32>
    %32 = vector.broadcast %28 : vector<8x1xf32> to vector<8x128xf32>
    %33 = arith.cmpf ole, %32, %2 : vector<8x128xf32>
    %34 = vector.broadcast %31 : vector<8x1xf32> to vector<8x128xf32>
    %35 = arith.cmpf oge, %34, %2 : vector<8x128xf32>
    %36 = arith.andi %33, %35 : vector<8x128xi1>
    %c0_12 = arith.constant 0 : index
    %c1 = arith.constant 1 : index
    %c0_13 = arith.constant 0 : index
    %37 = vector.load %arg2[%c0_12, %c1, %c0_13] : memref<8x7x128xi32, #tpu.memory_space<vmem>>, vector<8x1x128xi32>
    %38 = arith.extui %36 : vector<8x128xi1> to vector<8x128xi32>
    %39 = vector.shape_cast %37 : vector<8x1x128xi32> to vector<8x128xi32>
    %40 = vector.shape_cast %38 : vector<8x128xi32> to vector<8x1x128xi32>
    %cst_14 = arith.constant dense<0> : vector<8x128xi32>
    %41 = arith.cmpi ne, %39, %cst_14 : vector<8x128xi32>
    tpu.vector_store %arg2[%c0_12, %c1, %c0_13], %40 {strides = array<i32>} : memref<8x7x128xi32, #tpu.memory_space<vmem>>, vector<8x1x128xi32>,
    %cst_15 = arith.constant 2.000000e+00 : f32
    %42 = vector.broadcast %cst_15 : f32 to vector<8x1xf32>
    %43 = arith.mulf %9, %42 : vector<8x1xf32>
    %44 = arith.addf %4, %43 : vector<8x1xf32>
    %cst_16 = arith.constant 1.000000e+02 : f32
    %45 = vector.broadcast %cst_16 : f32 to vector<8x1xf32>
    %46 = arith.addf %44, %45 : vector<8x1xf32>
    %47 = arith.minimumf %46, %6 : vector<8x1xf32>
    %48 = vector.broadcast %44 : vector<8x1xf32> to vector<8x128xf32>
    %49 = arith.cmpf ole, %48, %2 : vector<8x128xf32>
    %50 = vector.broadcast %47 : vector<8x1xf32> to vector<8x128xf32>
    %51 = arith.cmpf oge, %50, %2 : vector<8x128xf32>
    %52 = arith.andi %49, %51 : vector<8x128xi1>
    %c0_17 = arith.constant 0 : index
    %c2 = arith.constant 2 : index
    %c0_18 = arith.constant 0 : index
    %53 = vector.load %arg2[%c0_17, %c2, %c0_18] : memref<8x7x128xi32, #tpu.memory_space<vmem>>, vector<8x1x128xi32>
    %54 = arith.extui %52 : vector<8x128xi1> to vector<8x128xi32>
    %55 = vector.shape_cast %53 : vector<8x1x128xi32> to vector<8x128xi32>
    %56 = vector.shape_cast %54 : vector<8x128xi32> to vector<8x1x128xi32>
    %cst_19 = arith.constant dense<0> : vector<8x128xi32>
    %57 = arith.cmpi ne, %55, %cst_19 : vector<8x128xi32>
    tpu.vector_store %arg2[%c0_17, %c2, %c0_18], %56 {strides = array<i32>} : memref<8x7x128xi32, #tpu.memory_space<vmem>>, vector<8x1x128xi32>,
    %cst_20 = arith.constant 3.000000e+00 : f32
    %58 = vector.broadcast %cst_20 : f32 to vector<8x1xf32>
    %59 = arith.mulf %9, %58 : vector<8x1xf32>
    %60 = arith.addf %4, %59 : vector<8x1xf32>
    %cst_21 = arith.constant 1.000000e+02 : f32
    %61 = vector.broadcast %cst_21 : f32 to vector<8x1xf32>
    %62 = arith.addf %60, %61 : vector<8x1xf32>
    %63 = arith.minimumf %62, %6 : vector<8x1xf32>
    %64 = vector.broadcast %60 : vector<8x1xf32> to vector<8x128xf32>
    %65 = arith.cmpf ole, %64, %2 : vector<8x128xf32>
    %66 = vector.broadcast %63 : vector<8x1xf32> to vector<8x128xf32>
    %67 = arith.cmpf oge, %66, %2 : vector<8x128xf32>
    %68 = arith.andi %65, %67 : vector<8x128xi1>
    %c0_22 = arith.constant 0 : index
    %c3 = arith.constant 3 : index
    %c0_23 = arith.constant 0 : index
    %69 = vector.load %arg2[%c0_22, %c3, %c0_23] : memref<8x7x128xi32, #tpu.memory_space<vmem>>, vector<8x1x128xi32>
    %70 = arith.extui %68 : vector<8x128xi1> to vector<8x128xi32>
    %71 = vector.shape_cast %69 : vector<8x1x128xi32> to vector<8x128xi32>
    %72 = vector.shape_cast %70 : vector<8x128xi32> to vector<8x1x128xi32>
    %cst_24 = arith.constant dense<0> : vector<8x128xi32>
    %73 = arith.cmpi ne, %71, %cst_24 : vector<8x128xi32>
    tpu.vector_store %arg2[%c0_22, %c3, %c0_23], %72 {strides = array<i32>} : memref<8x7x128xi32, #tpu.memory_space<vmem>>, vector<8x1x128xi32>,
    %cst_25 = arith.constant 4.000000e+00 : f32
    %74 = vector.broadcast %cst_25 : f32 to vector<8x1xf32>
    %75 = arith.mulf %9, %74 : vector<8x1xf32>
    %76 = arith.addf %4, %75 : vector<8x1xf32>
    %cst_26 = arith.constant 1.000000e+02 : f32
    %77 = vector.broadcast %cst_26 : f32 to vector<8x1xf32>
    %78 = arith.addf %76, %77 : vector<8x1xf32>
    %79 = arith.minimumf %78, %6 : vector<8x1xf32>
    %80 = vector.broadcast %76 : vector<8x1xf32> to vector<8x128xf32>
    %81 = arith.cmpf ole, %80, %2 : vector<8x128xf32>
    %82 = vector.broadcast %79 : vector<8x1xf32> to vector<8x128xf32>
    %83 = arith.cmpf oge, %82, %2 : vector<8x128xf32>
    %84 = arith.andi %81, %83 : vector<8x128xi1>
    %c0_27 = arith.constant 0 : index
    %c4 = arith.constant 4 : index
    %c0_28 = arith.constant 0 : index
    %85 = vector.load %arg2[%c0_27, %c4, %c0_28] : memref<8x7x128xi32, #tpu.memory_space<vmem>>, vector<8x1x128xi32>
    %86 = arith.extui %84 : vector<8x128xi1> to vector<8x128xi32>
    %87 = vector.shape_cast %85 : vector<8x1x128xi32> to vector<8x128xi32>
    %88 = vector.shape_cast %86 : vector<8x128xi32> to vector<8x1x128xi32>
    %cst_29 = arith.constant dense<0> : vector<8x128xi32>
    %89 = arith.cmpi ne, %87, %cst_29 : vector<8x128xi32>
    tpu.vector_store %arg2[%c0_27, %c4, %c0_28], %88 {strides = array<i32>} : memref<8x7x128xi32, #tpu.memory_space<vmem>>, vector<8x1x128xi32>,
    %cst_30 = arith.constant 5.000000e+00 : f32
    %90 = vector.broadcast %cst_30 : f32 to vector<8x1xf32>
    %91 = arith.mulf %9, %90 : vector<8x1xf32>
    %92 = arith.addf %4, %91 : vector<8x1xf32>
    %cst_31 = arith.constant 1.000000e+02 : f32
    %93 = vector.broadcast %cst_31 : f32 to vector<8x1xf32>
    %94 = arith.addf %92, %93 : vector<8x1xf32>
    %95 = arith.minimumf %94, %6 : vector<8x1xf32>
    %96 = vector.broadcast %92 : vector<8x1xf32> to vector<8x128xf32>
    %97 = arith.cmpf ole, %96, %2 : vector<8x128xf32>
    %98 = vector.broadcast %95 : vector<8x1xf32> to vector<8x128xf32>
    %99 = arith.cmpf oge, %98, %2 : vector<8x128xf32>
    %100 = arith.andi %97, %99 : vector<8x128xi1>
    %c0_32 = arith.constant 0 : index
    %c5 = arith.constant 5 : index
    %c0_33 = arith.constant 0 : index
    %101 = vector.load %arg2[%c0_32, %c5, %c0_33] : memref<8x7x128xi32, #tpu.memory_space<vmem>>, vector<8x1x128xi32>
    %102 = arith.extui %100 : vector<8x128xi1> to vector<8x128xi32>
    %103 = vector.shape_cast %101 : vector<8x1x128xi32> to vector<8x128xi32>
    %104 = vector.shape_cast %102 : vector<8x128xi32> to vector<8x1x128xi32>
    %cst_34 = arith.constant dense<0> : vector<8x128xi32>
    %105 = arith.cmpi ne, %103, %cst_34 : vector<8x128xi32>
    tpu.vector_store %arg2[%c0_32, %c5, %c0_33], %104 {strides = array<i32>} : memref<8x7x128xi32, #tpu.memory_space<vmem>>, vector<8x1x128xi32>,
    %cst_35 = arith.constant 6.000000e+00 : f32
    %106 = vector.broadcast %cst_35 : f32 to vector<8x1xf32>
    %107 = arith.mulf %9, %106 : vector<8x1xf32>
    %108 = arith.addf %4, %107 : vector<8x1xf32>
    %cst_36 = arith.constant 1.000000e+02 : f32
    %109 = vector.broadcast %cst_36 : f32 to vector<8x1xf32>
    %110 = arith.addf %108, %109 : vector<8x1xf32>
    %111 = arith.minimumf %110, %6 : vector<8x1xf32>
    %112 = vector.broadcast %108 : vector<8x1xf32> to vector<8x128xf32>
    %113 = arith.cmpf ole, %112, %2 : vector<8x128xf32>
    %114 = vector.broadcast %111 : vector<8x1xf32> to vector<8x128xf32>
    %115 = arith.cmpf oge, %114, %2 : vector<8x128xf32>
    %116 = arith.andi %113, %115 : vector<8x128xi1>
    %c0_37 = arith.constant 0 : index
    %c6 = arith.constant 6 : index
    %c0_38 = arith.constant 0 : index
    %117 = vector.load %arg2[%c0_37, %c6, %c0_38] : memref<8x7x128xi32, #tpu.memory_space<vmem>>, vector<8x1x128xi32>
    %118 = arith.extui %116 : vector<8x128xi1> to vector<8x128xi32>
    %119 = vector.shape_cast %117 : vector<8x1x128xi32> to vector<8x128xi32>
    %120 = vector.shape_cast %118 : vector<8x128xi32> to vector<8x1x128xi32>
    %cst_39 = arith.constant dense<0> : vector<8x128xi32>
    %121 = arith.cmpi ne, %119, %cst_39 : vector<8x128xi32>
    tpu.vector_store %arg2[%c0_37, %c6, %c0_38], %120 {strides = array<i32>} : memref<8x7x128xi32, #tpu.memory_space<vmem>>, vector<8x1x128xi32>,
    return
  }
  func.func @transform_0(%arg0: i32) -> (i32, i32, i32) {
    %c0_i32 = arith.constant 0 : i32
    %c0_i32_0 = arith.constant 0 : i32
    %c0_i32_1 = arith.constant 0 : i32
    return %arg0, %c0_i32, %c0_i32_0 : i32, i32, i32
  }
  func.func @transform_1(%arg0: i32) -> (i32, i32, i32) {
    %c0_i32 = arith.constant 0 : i32
    %c0_i32_0 = arith.constant 0 : i32
    %c0_i32_1 = arith.constant 0 : i32
    return %arg0, %c0_i32, %c0_i32_0 : i32, i32, i32
  }
}

</mosaic_0001>

<llo_original>
// kernel: tpu_custom_call.1
$region0: #{tpu_custom_call.1}
  #allocation0 [shape = 'u32[]', space=smem, size = 0x4, offset = 0x4, fixed_abs, tag = 'smem constant byte address 0x4 - core index']
  #allocation1 [shape = 'u32[72,128]{1,0:T(1,128)}', space=vmem, size = 0x9000, scoped, tag = 'internal scratch']
  %s0 = inlined_call_operand.vmem [shape: f32[16,128,3], index: 0, kind: input, shape index: {}]
  %s1 = inlined_call_operand.vmem [shape: s32[16,7,128], index: 1, kind: output, shape index: {}]
  %s2 = sld [smem:[#allocation0]]
  $region37: #{tpu_custom_call.1} parent=0
    _
  %s4 = ssub.s32 1, %s2
  %s5 = scalar_select 0, %s4, %s2
  loop: start=0, step=1, limit=4
  $region2: #{tpu_custom_call.1} parent=0 // loop_pre_header
    _
  $region3: #{tpu_custom_call.1} parent=0 // loop_header
    %s7 = sphi 0, %s11
    %p8 = scmp.ge.s32.totalorder %s7, 4
    %s17 = sphi 0, %s19
    %s20 = sphi 0, %s17
    %s21 = sphi 0, %s20
    %s37 = sphi 0, %s21
    %s43 = sphi 0, %s45
    %s46 = sphi 0, %s43
    %s47 = sphi 0, %s46
    %s63 = sphi 0, %s47
  $region4: #{tpu_custom_call.1} parent=0 // loop_header_branch
    %10 = sbr.rel (%p8) target = $region8
  $region5: #{tpu_custom_call.1} parent=0 // loop_body
    %s12 = ssub.s32 %s7, 1
    %s13 = ssub.s32 %s7, 2
    %s14 = sadd.s32 %s7, 1
    %s15 = ssub.s32 %s7, %s14
    %p16 = scmp.eq.s32.totalorder %s15, 0
    %s18 = sadd.s32 %s17, 1
    %s19 = scalar_select %p16, %s17, %s18
    %p22 = pneg %p16
    %p23 = scmp.eq.s32.totalorder %s7, 1
    %p24 = por %p22, %p23
    %p25 = scmp.ne.s32.totalorder %s17, %s20
    %p26 = scmp.eq.s32.totalorder %s7, 0
    %p27 = por %p25, %p26
    %p28 = scmp.ne.s32.totalorder %s17, %s20
    %p29 = scmp.eq.s32.totalorder %s12, 1
    %p30 = por %p28, %p29
    %p31 = scmp.ne.s32.totalorder %s20, %s21
    %p32 = scmp.eq.s32.totalorder %s12, 0
    %p33 = por %p31, %p32
    %p34 = scmp.ne.s32.totalorder %s20, %s21
    %p35 = scmp.eq.s32.totalorder %s13, 1
    %p36 = por %p34, %p35
    %p38 = scmp.ne.s32.totalorder %s21, %s37
    %p39 = scmp.eq.s32.totalorder %s13, 0
    %p40 = por %p38, %p39
    %s41 = ssub.s32 %s7, %s14
    %p42 = scmp.eq.s32.totalorder %s41, 0
    %s44 = sadd.s32 %s43, 1
    %s45 = scalar_select %p42, %s43, %s44
    %p48 = pneg %p42
    %p49 = scmp.eq.s32.totalorder %s7, 1
    %p50 = por %p48, %p49
    %p51 = scmp.ne.s32.totalorder %s43, %s46
    %p52 = scmp.eq.s32.totalorder %s7, 0
    %p53 = por %p51, %p52
    %p54 = scmp.ne.s32.totalorder %s43, %s46
    %p55 = scmp.eq.s32.totalorder %s12, 1
    %p56 = por %p54, %p55
    %p57 = scmp.ne.s32.totalorder %s46, %s47
    %p58 = scmp.eq.s32.totalorder %s12, 0
    %p59 = por %p57, %p58
    %p60 = scmp.ne.s32.totalorder %s46, %s47
    %p61 = scmp.eq.s32.totalorder %s13, 1
    %p62 = por %p60, %p61
    %p64 = scmp.ne.s32.totalorder %s47, %s63
    %p65 = scmp.eq.s32.totalorder %s13, 0
    %p66 = por %p64, %p65
    %p67 = scmp.le.s32.totalorder 1, %s7
    %p68 = scmp.lt.s32.totalorder %s7, 3
    %p69 = pnand %p67, %p68
    %p70 = pneg %p69
    // Predicated region
    $region9: #{tpu_custom_call.1} parent=5 // pred_check
      _
    $region10: #{tpu_custom_call.1} parent=5 // pred_check_branch
      %72 = sbr.rel (%p69) target = $region12
    $region11: #{tpu_custom_call.1} parent=5 // pred_region
      %s73 = ssub.s32 %s7, 1
    $region12: #{tpu_custom_call.1} parent=5 // pred_fallthru
      _
    %p74 = scmp.lt.s32.totalorder %s7, 2
    // Predicated region
    $region13: #{tpu_custom_call.1} parent=5 // pred_check
      %p75 = pneg %p74
    $region14: #{tpu_custom_call.1} parent=5 // pred_check_branch
      %77 = sbr.rel (%p75) target = $region16
    $region15: #{tpu_custom_call.1} parent=5 // pred_region
      // Predicated region
      $region17: #{tpu_custom_call.1} parent=15 // pred_check
        %p78 = pneg %p27
      $region18: #{tpu_custom_call.1} parent=15 // pred_check_branch
        %80 = sbr.rel (%p78) target = $region20
      $region19: #{tpu_custom_call.1} parent=15 // pred_region
        %s81 = smul.u32 8, %s7
        %p82 = scmp.lt.s32.totalorder %s81, 15
        %s83 = scalar_select %p82, %s81, 15
        %s84 = smul.addr %s83, 16
        %s85 = smul.addr %s84, 8
        %s86 = scalar_lea.vmem %s0, %s85
        %s87 = smul.u32 8, %s7
      $region20: #{tpu_custom_call.1} parent=15 // pred_fallthru
        _
    $region16: #{tpu_custom_call.1} parent=5 // pred_fallthru
      _
    %p88 = scmp.le.s32.totalorder 1, %s7
    %p89 = scmp.lt.s32.totalorder %s7, 3
    %p90 = pnand %p88, %p89
    %p91 = pneg %p90
    // Predicated region
    $region21: #{tpu_custom_call.1} parent=5 // pred_check
      _
    $region22: #{tpu_custom_call.1} parent=5 // pred_check_branch
      %93 = sbr.rel (%p90) target = $region24
    $region23: #{tpu_custom_call.1} parent=5 // pred_region
      %s94 = ssub.s32 %s7, 1
      %s95 = smul.u32 8, %s12
      %p96 = scmp.lt.s32.totalorder %s95, 15
      %s97 = scalar_select %p96, %s95, 15
      %s98 = smul.addr %s97, 16
      %s99 = smul.addr %s98, 8
      %s100 = scalar_lea.vmem %s0, %s99
      %p101 = pneg %p33
      %p102 = pneg %p30
      %p103 = pneg %p59
      %p104 = pneg %p56
      %s105 = smul.u32 8, %s12
      %p106 = scmp.lt.s32.totalorder %s105, 15
      %s107 = scalar_select %p106, %s105, 15
      %s108 = smul.addr %s107, 8
      %s109 = scalar_lea.vmem %s1, %s108
      %s110 = smul.u32 8, %s12
      %p111 = scmp.lt.s32.totalorder %s110, 15
      %s112 = scalar_select %p111, %s110, 15
      %s113 = smul.addr %s112, 16
      %s114 = smul.addr %s113, 8
      %s115 = scalar_lea.vmem %s0, %s114
      %s116 = smul.u32 8, %s12
      %s117 = smul.u32 8, %s12
      %p118 = scmp.lt.s32.totalorder %s117, 15
      %s119 = scalar_select %p118, %s117, 15
      %s120 = smul.addr %s119, 8
      %s121 = scalar_lea.vmem %s1, %s120
      %s122 = smul.u32 8, %s12
      %v123 = vld [vmem:[%s115] sm:$0xff]
      %v124 = vld [vmem:[%s115 + $0x8] sm:$0xff]
      %v125 = vld [vmem:[%s115 + $0x10] sm:$0xff]
      %v126 = vld [vmem:[%s115 + $0x18] sm:$0xff]
      %v127 = vld [vmem:[%s115 + $0x20] sm:$0xff]
      %v128 = vld [vmem:[%s115 + $0x28] sm:$0xff]
      %v129 = vld [vmem:[%s115 + $0x30] sm:$0xff]
      %v130 = vld [vmem:[%s115 + $0x38] sm:$0xff]
      %v131 = vld [vmem:[%s115 + $0x40] sm:$0xff]
      %v132 = vld [vmem:[%s115 + $0x48] sm:$0xff]
      %v133 = vld [vmem:[%s115 + $0x50] sm:$0xff]
      %v134 = vld [vmem:[%s115 + $0x58] sm:$0xff]
      %v135 = vld [vmem:[%s115 + $0x60] sm:$0xff]
      %v136 = vld [vmem:[%s115 + $0x68] sm:$0xff]
      %v137 = vld [vmem:[%s115 + $0x70] sm:$0xff]
      %v138 = vld [vmem:[%s115 + $0x78] sm:$0xff]
      %v139 = vld [vmem:[%s115 + $0x80] sm:$0xff]
      %v140 = vld [vmem:[%s115 + $0x88] sm:$0xff]
      %v141 = vld [vmem:[%s115 + $0x90] sm:$0xff]
      %v142 = vld [vmem:[%s115 + $0x98] sm:$0xff]
      %v143 = vld [vmem:[%s115 + $0xa0] sm:$0xff]
      %v144 = vld [vmem:[%s115 + $0xa8] sm:$0xff]
      %v145 = vld [vmem:[%s115 + $0xb0] sm:$0xff]
      %v146 = vld [vmem:[%s115 + $0xb8] sm:$0xff]
      %v147 = vld [vmem:[%s115 + $0xc0] sm:$0xff]
      %v148 = vld [vmem:[%s115 + $0xc8] sm:$0xff]
      %v149 = vld [vmem:[%s115 + $0xd0] sm:$0xff]
      %v150 = vld [vmem:[%s115 + $0xd8] sm:$0xff]
      %v151 = vld [vmem:[%s115 + $0xe0] sm:$0xff]
      %v152 = vld [vmem:[%s115 + $0xe8] sm:$0xff]
      %v153 = vld [vmem:[%s115 + $0xf0] sm:$0xff]
      %v154 = vld [vmem:[%s115 + $0xf8] sm:$0xff]
      %v155 = vld [vmem:[%s115 + $0x100] sm:$0xff]
      %v156 = vld [vmem:[%s115 + $0x108] sm:$0xff]
      %v157 = vld [vmem:[%s115 + $0x110] sm:$0xff]
      %v158 = vld [vmem:[%s115 + $0x118] sm:$0xff]
      %v159 = vld [vmem:[%s115 + $0x120] sm:$0xff]
      %v160 = vld [vmem:[%s115 + $0x128] sm:$0xff]
      %v161 = vld [vmem:[%s115 + $0x130] sm:$0xff]
      %v162 = vld [vmem:[%s115 + $0x138] sm:$0xff]
      %v163 = vld [vmem:[%s115 + $0x140] sm:$0xff]
      %v164 = vld [vmem:[%s115 + $0x148] sm:$0xff]
      %v165 = vld [vmem:[%s115 + $0x150] sm:$0xff]
      %v166 = vld [vmem:[%s115 + $0x158] sm:$0xff]
      %v167 = vld [vmem:[%s115 + $0x160] sm:$0xff]
      %v168 = vld [vmem:[%s115 + $0x168] sm:$0xff]
      %v169 = vld [vmem:[%s115 + $0x170] sm:$0xff]
      %v170 = vld [vmem:[%s115 + $0x178] sm:$0xff]
      %v171 = vld [vmem:[%s115 + $0x180] sm:$0xff]
      %v172 = vld [vmem:[%s115 + $0x188] sm:$0xff]
      %v173 = vld [vmem:[%s115 + $0x190] sm:$0xff]
      %v174 = vld [vmem:[%s115 + $0x198] sm:$0xff]
      %v175 = vld [vmem:[%s115 + $0x1a0] sm:$0xff]
      %v176 = vld [vmem:[%s115 + $0x1a8] sm:$0xff]
      %v177 = vld [vmem:[%s115 + $0x1b0] sm:$0xff]
      %v178 = vld [vmem:[%s115 + $0x1b8] sm:$0xff]
      %v179 = vld [vmem:[%s115 + $0x1c0] sm:$0xff]
      %v180 = vld [vmem:[%s115 + $0x1c8] sm:$0xff]
      %v181 = vld [vmem:[%s115 + $0x1d0] sm:$0xff]
      %v182 = vld [vmem:[%s115 + $0x1d8] sm:$0xff]
      %v183 = vld [vmem:[%s115 + $0x1e0] sm:$0xff]
      %v184 = vld [vmem:[%s115 + $0x1e8] sm:$0xff]
      %v185 = vld [vmem:[%s115 + $0x1f0] sm:$0xff]
      %v186 = vld [vmem:[%s115 + $0x1f8] sm:$0xff]
      %v187 = vld [vmem:[%s115 + $0x200] sm:$0xff]
      %v188 = vld [vmem:[%s115 + $0x208] sm:$0xff]
      %v189 = vld [vmem:[%s115 + $0x210] sm:$0xff]
      %v190 = vld [vmem:[%s115 + $0x218] sm:$0xff]
      %v191 = vld [vmem:[%s115 + $0x220] sm:$0xff]
      %v192 = vld [vmem:[%s115 + $0x228] sm:$0xff]
      %v193 = vld [vmem:[%s115 + $0x230] sm:$0xff]
      %v194 = vld [vmem:[%s115 + $0x238] sm:$0xff]
      %v195 = vld [vmem:[%s115 + $0x240] sm:$0xff]
      %v196 = vld [vmem:[%s115 + $0x248] sm:$0xff]
      %v197 = vld [vmem:[%s115 + $0x250] sm:$0xff]
      %v198 = vld [vmem:[%s115 + $0x258] sm:$0xff]
      %v199 = vld [vmem:[%s115 + $0x260] sm:$0xff]
      %v200 = vld [vmem:[%s115 + $0x268] sm:$0xff]
      %v201 = vld [vmem:[%s115 + $0x270] sm:$0xff]
      %v202 = vld [vmem:[%s115 + $0x278] sm:$0xff]
      %v203 = vld [vmem:[%s115 + $0x280] sm:$0xff]
      %v204 = vld [vmem:[%s115 + $0x288] sm:$0xff]
      %v205 = vld [vmem:[%s115 + $0x290] sm:$0xff]
      %v206 = vld [vmem:[%s115 + $0x298] sm:$0xff]
      %v207 = vld [vmem:[%s115 + $0x2a0] sm:$0xff]
      %v208 = vld [vmem:[%s115 + $0x2a8] sm:$0xff]
      %v209 = vld [vmem:[%s115 + $0x2b0] sm:$0xff]
      %v210 = vld [vmem:[%s115 + $0x2b8] sm:$0xff]
      %v211 = vld [vmem:[%s115 + $0x2c0] sm:$0xff]
      %v212 = vld [vmem:[%s115 + $0x2c8] sm:$0xff]
      %v213 = vld [vmem:[%s115 + $0x2d0] sm:$0xff]
      %v214 = vld [vmem:[%s115 + $0x2d8] sm:$0xff]
      %v215 = vld [vmem:[%s115 + $0x2e0] sm:$0xff]
      %v216 = vld [vmem:[%s115 + $0x2e8] sm:$0xff]
      %v217 = vld [vmem:[%s115 + $0x2f0] sm:$0xff]
      %v218 = vld [vmem:[%s115 + $0x2f8] sm:$0xff]
      %v219 = vld [vmem:[%s115 + $0x300] sm:$0xff]
      %v220 = vld [vmem:[%s115 + $0x308] sm:$0xff]
      %v221 = vld [vmem:[%s115 + $0x310] sm:$0xff]
      %v222 = vld [vmem:[%s115 + $0x318] sm:$0xff]
      %v223 = vld [vmem:[%s115 + $0x320] sm:$0xff]
      %v224 = vld [vmem:[%s115 + $0x328] sm:$0xff]
      %v225 = vld [vmem:[%s115 + $0x330] sm:$0xff]
      %v226 = vld [vmem:[%s115 + $0x338] sm:$0xff]
      %v227 = vld [vmem:[%s115 + $0x340] sm:$0xff]
      %v228 = vld [vmem:[%s115 + $0x348] sm:$0xff]
      %v229 = vld [vmem:[%s115 + $0x350] sm:$0xff]
      %v230 = vld [vmem:[%s115 + $0x358] sm:$0xff]
      %v231 = vld [vmem:[%s115 + $0x360] sm:$0xff]
      %v232 = vld [vmem:[%s115 + $0x368] sm:$0xff]
      %v233 = vld [vmem:[%s115 + $0x370] sm:$0xff]
      %v234 = vld [vmem:[%s115 + $0x378] sm:$0xff]
      %v235 = vld [vmem:[%s115 + $0x380] sm:$0xff]
      %v236 = vld [vmem:[%s115 + $0x388] sm:$0xff]
      %v237 = vld [vmem:[%s115 + $0x390] sm:$0xff]
      %v238 = vld [vmem:[%s115 + $0x398] sm:$0xff]
      %v239 = vld [vmem:[%s115 + $0x3a0] sm:$0xff]
      %v240 = vld [vmem:[%s115 + $0x3a8] sm:$0xff]
      %v241 = vld [vmem:[%s115 + $0x3b0] sm:$0xff]
      %v242 = vld [vmem:[%s115 + $0x3b8] sm:$0xff]
      %v243 = vld [vmem:[%s115 + $0x3c0] sm:$0xff]
      %v244 = vld [vmem:[%s115 + $0x3c8] sm:$0xff]
      %v245 = vld [vmem:[%s115 + $0x3d0] sm:$0xff]
      %v246 = vld [vmem:[%s115 + $0x3d8] sm:$0xff]
      %v247 = vld [vmem:[%s115 + $0x3e0] sm:$0xff]
      %v248 = vld [vmem:[%s115 + $0x3e8] sm:$0xff]
      %v249 = vld [vmem:[%s115 + $0x3f0] sm:$0xff]
      %v250 = vld [vmem:[%s115 + $0x3f8] sm:$0xff]
      %379 = vset.pattern.permute.xlu0 0
      %380 = vperm.xlu0 %379, %v123
      %v381 = vpop.permute.xlu0 %380
      %382 = vset.pattern.permute.xlu0 0
      %383 = vperm.xlu0 %382, %v124
      %v384 = vpop.permute.xlu0 %383
      %385 = vset.pattern.permute.xlu0 0
      %386 = vperm.xlu0 %385, %v125
      %v387 = vpop.permute.xlu0 %386
      %388 = vset.pattern.permute.xlu0 0
      %389 = vperm.xlu0 %388, %v126
      %v390 = vpop.permute.xlu0 %389
      %391 = vset.pattern.permute.xlu0 0
      %392 = vperm.xlu0 %391, %v127
      %v393 = vpop.permute.xlu0 %392
      %394 = vset.pattern.permute.xlu0 0
      %395 = vperm.xlu0 %394, %v128
      %v396 = vpop.permute.xlu0 %395
      %397 = vset.pattern.permute.xlu0 0
      %398 = vperm.xlu0 %397, %v129
      %v399 = vpop.permute.xlu0 %398
      %400 = vset.pattern.permute.xlu0 0
      %401 = vperm.xlu0 %400, %v130
      %v402 = vpop.permute.xlu0 %401
      %403 = vset.pattern.permute.xlu0 0
      %404 = vperm.xlu0 %403, %v131
      %v405 = vpop.permute.xlu0 %404
      %406 = vset.pattern.permute.xlu0 0
      %407 = vperm.xlu0 %406, %v132
      %v408 = vpop.permute.xlu0 %407
      %409 = vset.pattern.permute.xlu0 0
      %410 = vperm.xlu0 %409, %v133
      %v411 = vpop.permute.xlu0 %410
      %412 = vset.pattern.permute.xlu0 0
      %413 = vperm.xlu0 %412, %v134
      %v414 = vpop.permute.xlu0 %413
      %415 = vset.pattern.permute.xlu0 0
      %416 = vperm.xlu0 %415, %v135
      %v417 = vpop.permute.xlu0 %416
      %418 = vset.pattern.permute.xlu0 0
      %419 = vperm.xlu0 %418, %v136
      %v420 = vpop.permute.xlu0 %419
      %421 = vset.pattern.permute.xlu0 0
      %422 = vperm.xlu0 %421, %v137
      %v423 = vpop.permute.xlu0 %422
      %424 = vset.pattern.permute.xlu0 0
      %425 = vperm.xlu0 %424, %v138
      %v426 = vpop.permute.xlu0 %425
      %427 = vset.pattern.permute.xlu0 0
      %428 = vperm.xlu0 %427, %v139
      %v429 = vpop.permute.xlu0 %428
      %430 = vset.pattern.permute.xlu0 0
      %431 = vperm.xlu0 %430, %v140
      %v432 = vpop.permute.xlu0 %431
      %433 = vset.pattern.permute.xlu0 0
      %434 = vperm.xlu0 %433, %v141
      %v435 = vpop.permute.xlu0 %434
      %436 = vset.pattern.permute.xlu0 0
      %437 = vperm.xlu0 %436, %v142
      %v438 = vpop.permute.xlu0 %437
      %439 = vset.pattern.permute.xlu0 0
      %440 = vperm.xlu0 %439, %v143
      %v441 = vpop.permute.xlu0 %440
      %442 = vset.pattern.permute.xlu0 0
      %443 = vperm.xlu0 %442, %v144
      %v444 = vpop.permute.xlu0 %443
      %445 = vset.pattern.permute.xlu0 0
      %446 = vperm.xlu0 %445, %v145
      %v447 = vpop.permute.xlu0 %446
      %448 = vset.pattern.permute.xlu0 0
      %449 = vperm.xlu0 %448, %v146
      %v450 = vpop.permute.xlu0 %449
      %451 = vset.pattern.permute.xlu0 0
      %452 = vperm.xlu0 %451, %v147
      %v453 = vpop.permute.xlu0 %452
      %454 = vset.pattern.permute.xlu0 0
      %455 = vperm.xlu0 %454, %v148
      %v456 = vpop.permute.xlu0 %455
      %457 = vset.pattern.permute.xlu0 0
      %458 = vperm.xlu0 %457, %v149
      %v459 = vpop.permute.xlu0 %458
      %460 = vset.pattern.permute.xlu0 0
      %461 = vperm.xlu0 %460, %v150
      %v462 = vpop.permute.xlu0 %461
      %463 = vset.pattern.permute.xlu0 0
      %464 = vperm.xlu0 %463, %v151
      %v465 = vpop.permute.xlu0 %464
      %466 = vset.pattern.permute.xlu0 0
      %467 = vperm.xlu0 %466, %v152
      %v468 = vpop.permute.xlu0 %467
      %469 = vset.pattern.permute.xlu0 0
      %470 = vperm.xlu0 %469, %v153
      %v471 = vpop.permute.xlu0 %470
      %472 = vset.pattern.permute.xlu0 0
      %473 = vperm.xlu0 %472, %v154
      %v474 = vpop.permute.xlu0 %473
      %475 = vset.pattern.permute.xlu0 0
      %476 = vperm.xlu0 %475, %v155
      %v477 = vpop.permute.xlu0 %476
      %478 = vset.pattern.permute.xlu0 0
      %479 = vperm.xlu0 %478, %v156
      %v480 = vpop.permute.xlu0 %479
      %481 = vset.pattern.permute.xlu0 0
      %482 = vperm.xlu0 %481, %v157
      %v483 = vpop.permute.xlu0 %482
      %484 = vset.pattern.permute.xlu0 0
      %485 = vperm.xlu0 %484, %v158
      %v486 = vpop.permute.xlu0 %485
      %487 = vset.pattern.permute.xlu0 0
      %488 = vperm.xlu0 %487, %v159
      %v489 = vpop.permute.xlu0 %488
      %490 = vset.pattern.permute.xlu0 0
      %491 = vperm.xlu0 %490, %v160
      %v492 = vpop.permute.xlu0 %491
      %493 = vset.pattern.permute.xlu0 0
      %494 = vperm.xlu0 %493, %v161
      %v495 = vpop.permute.xlu0 %494
      %496 = vset.pattern.permute.xlu0 0
      %497 = vperm.xlu0 %496, %v162
      %v498 = vpop.permute.xlu0 %497
      %499 = vset.pattern.permute.xlu0 0
      %500 = vperm.xlu0 %499, %v163
      %v501 = vpop.permute.xlu0 %500
      %502 = vset.pattern.permute.xlu0 0
      %503 = vperm.xlu0 %502, %v164
      %v504 = vpop.permute.xlu0 %503
      %505 = vset.pattern.permute.xlu0 0
      %506 = vperm.xlu0 %505, %v165
      %v507 = vpop.permute.xlu0 %506
      %508 = vset.pattern.permute.xlu0 0
      %509 = vperm.xlu0 %508, %v166
      %v510 = vpop.permute.xlu0 %509
      %511 = vset.pattern.permute.xlu0 0
      %512 = vperm.xlu0 %511, %v167
      %v513 = vpop.permute.xlu0 %512
      %514 = vset.pattern.permute.xlu0 0
      %515 = vperm.xlu0 %514, %v168
      %v516 = vpop.permute.xlu0 %515
      %517 = vset.pattern.permute.xlu0 0
      %518 = vperm.xlu0 %517, %v169
      %v519 = vpop.permute.xlu0 %518
      %520 = vset.pattern.permute.xlu0 0
      %521 = vperm.xlu0 %520, %v170
      %v522 = vpop.permute.xlu0 %521
      %523 = vset.pattern.permute.xlu0 0
      %524 = vperm.xlu0 %523, %v171
      %v525 = vpop.permute.xlu0 %524
      %526 = vset.pattern.permute.xlu0 0
      %527 = vperm.xlu0 %526, %v172
      %v528 = vpop.permute.xlu0 %527
      %529 = vset.pattern.permute.xlu0 0
      %530 = vperm.xlu0 %529, %v173
      %v531 = vpop.permute.xlu0 %530
      %532 = vset.pattern.permute.xlu0 0
      %533 = vperm.xlu0 %532, %v174
      %v534 = vpop.permute.xlu0 %533
      %535 = vset.pattern.permute.xlu0 0
      %536 = vperm.xlu0 %535, %v175
      %v537 = vpop.permute.xlu0 %536
      %538 = vset.pattern.permute.xlu0 0
      %539 = vperm.xlu0 %538, %v176
      %v540 = vpop.permute.xlu0 %539
      %541 = vset.pattern.permute.xlu0 0
      %542 = vperm.xlu0 %541, %v177
      %v543 = vpop.permute.xlu0 %542
      %544 = vset.pattern.permute.xlu0 0
      %545 = vperm.xlu0 %544, %v178
      %v546 = vpop.permute.xlu0 %545
      %547 = vset.pattern.permute.xlu0 0
      %548 = vperm.xlu0 %547, %v179
      %v549 = vpop.permute.xlu0 %548
      %550 = vset.pattern.permute.xlu0 0
      %551 = vperm.xlu0 %550, %v180
      %v552 = vpop.permute.xlu0 %551
      %553 = vset.pattern.permute.xlu0 0
      %554 = vperm.xlu0 %553, %v181
      %v555 = vpop.permute.xlu0 %554
      %556 = vset.pattern.permute.xlu0 0
      %557 = vperm.xlu0 %556, %v182
      %v558 = vpop.permute.xlu0 %557
      %559 = vset.pattern.permute.xlu0 0
      %560 = vperm.xlu0 %559, %v183
      %v561 = vpop.permute.xlu0 %560
      %562 = vset.pattern.permute.xlu0 0
      %563 = vperm.xlu0 %562, %v184
      %v564 = vpop.permute.xlu0 %563
      %565 = vset.pattern.permute.xlu0 0
      %566 = vperm.xlu0 %565, %v185
      %v567 = vpop.permute.xlu0 %566
      %568 = vset.pattern.permute.xlu0 0
      %569 = vperm.xlu0 %568, %v186
      %v570 = vpop.permute.xlu0 %569
      %571 = vset.pattern.permute.xlu0 0
      %572 = vperm.xlu0 %571, %v187
      %v573 = vpop.permute.xlu0 %572
      %574 = vset.pattern.permute.xlu0 0
      %575 = vperm.xlu0 %574, %v188
      %v576 = vpop.permute.xlu0 %575
      %577 = vset.pattern.permute.xlu0 0
      %578 = vperm.xlu0 %577, %v189
      %v579 = vpop.permute.xlu0 %578
      %580 = vset.pattern.permute.xlu0 0
      %581 = vperm.xlu0 %580, %v190
      %v582 = vpop.permute.xlu0 %581
      %583 = vset.pattern.permute.xlu0 0
      %584 = vperm.xlu0 %583, %v191
      %v585 = vpop.permute.xlu0 %584
      %586 = vset.pattern.permute.xlu0 0
      %587 = vperm.xlu0 %586, %v192
      %v588 = vpop.permute.xlu0 %587
      %589 = vset.pattern.permute.xlu0 0
      %590 = vperm.xlu0 %589, %v193
      %v591 = vpop.permute.xlu0 %590
      %592 = vset.pattern.permute.xlu0 0
      %593 = vperm.xlu0 %592, %v194
      %v594 = vpop.permute.xlu0 %593
      %595 = vset.pattern.permute.xlu0 0
      %596 = vperm.xlu0 %595, %v195
      %v597 = vpop.permute.xlu0 %596
      %598 = vset.pattern.permute.xlu0 0
      %599 = vperm.xlu0 %598, %v196
      %v600 = vpop.permute.xlu0 %599
      %601 = vset.pattern.permute.xlu0 0
      %602 = vperm.xlu0 %601, %v197
      %v603 = vpop.permute.xlu0 %602
      %604 = vset.pattern.permute.xlu0 0
      %605 = vperm.xlu0 %604, %v198
      %v606 = vpop.permute.xlu0 %605
      %607 = vset.pattern.permute.xlu0 0
      %608 = vperm.xlu0 %607, %v199
      %v609 = vpop.permute.xlu0 %608
      %610 = vset.pattern.permute.xlu0 0
      %611 = vperm.xlu0 %610, %v200
      %v612 = vpop.permute.xlu0 %611
      %613 = vset.pattern.permute.xlu0 0
      %614 = vperm.xlu0 %613, %v201
      %v615 = vpop.permute.xlu0 %614
      %616 = vset.pattern.permute.xlu0 0
      %617 = vperm.xlu0 %616, %v202
      %v618 = vpop.permute.xlu0 %617
      %619 = vset.pattern.permute.xlu0 0
      %620 = vperm.xlu0 %619, %v203
      %v621 = vpop.permute.xlu0 %620
      %622 = vset.pattern.permute.xlu0 0
      %623 = vperm.xlu0 %622, %v204
      %v624 = vpop.permute.xlu0 %623
      %625 = vset.pattern.permute.xlu0 0
      %626 = vperm.xlu0 %625, %v205
      %v627 = vpop.permute.xlu0 %626
      %628 = vset.pattern.permute.xlu0 0
      %629 = vperm.xlu0 %628, %v206
      %v630 = vpop.permute.xlu0 %629
      %631 = vset.pattern.permute.xlu0 0
      %632 = vperm.xlu0 %631, %v207
      %v633 = vpop.permute.xlu0 %632
      %634 = vset.pattern.permute.xlu0 0
      %635 = vperm.xlu0 %634, %v208
      %v636 = vpop.permute.xlu0 %635
      %637 = vset.pattern.permute.xlu0 0
      %638 = vperm.xlu0 %637, %v209
      %v639 = vpop.permute.xlu0 %638
      %640 = vset.pattern.permute.xlu0 0
      %641 = vperm.xlu0 %640, %v210
      %v642 = vpop.permute.xlu0 %641
      %643 = vset.pattern.permute.xlu0 0
      %644 = vperm.xlu0 %643, %v211
      %v645 = vpop.permute.xlu0 %644
      %646 = vset.pattern.permute.xlu0 0
      %647 = vperm.xlu0 %646, %v212
      %v648 = vpop.permute.xlu0 %647
      %649 = vset.pattern.permute.xlu0 0
      %650 = vperm.xlu0 %649, %v213
      %v651 = vpop.permute.xlu0 %650
      %652 = vset.pattern.permute.xlu0 0
      %653 = vperm.xlu0 %652, %v214
      %v654 = vpop.permute.xlu0 %653
      %655 = vset.pattern.permute.xlu0 0
      %656 = vperm.xlu0 %655, %v215
      %v657 = vpop.permute.xlu0 %656
      %658 = vset.pattern.permute.xlu0 0
      %659 = vperm.xlu0 %658, %v216
      %v660 = vpop.permute.xlu0 %659
      %661 = vset.pattern.permute.xlu0 0
      %662 = vperm.xlu0 %661, %v217
      %v663 = vpop.permute.xlu0 %662
      %664 = vset.pattern.permute.xlu0 0
      %665 = vperm.xlu0 %664, %v218
      %v666 = vpop.permute.xlu0 %665
      %667 = vset.pattern.permute.xlu0 0
      %668 = vperm.xlu0 %667, %v219
      %v669 = vpop.permute.xlu0 %668
      %670 = vset.pattern.permute.xlu0 0
      %671 = vperm.xlu0 %670, %v220
      %v672 = vpop.permute.xlu0 %671
      %673 = vset.pattern.permute.xlu0 0
      %674 = vperm.xlu0 %673, %v221
      %v675 = vpop.permute.xlu0 %674
      %676 = vset.pattern.permute.xlu0 0
      %677 = vperm.xlu0 %676, %v222
      %v678 = vpop.permute.xlu0 %677
      %679 = vset.pattern.permute.xlu0 0
      %680 = vperm.xlu0 %679, %v223
      %v681 = vpop.permute.xlu0 %680
      %682 = vset.pattern.permute.xlu0 0
      %683 = vperm.xlu0 %682, %v224
      %v684 = vpop.permute.xlu0 %683
      %685 = vset.pattern.permute.xlu0 0
      %686 = vperm.xlu0 %685, %v225
      %v687 = vpop.permute.xlu0 %686
      %688 = vset.pattern.permute.xlu0 0
      %689 = vperm.xlu0 %688, %v226
      %v690 = vpop.permute.xlu0 %689
      %691 = vset.pattern.permute.xlu0 0
      %692 = vperm.xlu0 %691, %v227
      %v693 = vpop.permute.xlu0 %692
      %694 = vset.pattern.permute.xlu0 0
      %695 = vperm.xlu0 %694, %v228
      %v696 = vpop.permute.xlu0 %695
      %697 = vset.pattern.permute.xlu0 0
      %698 = vperm.xlu0 %697, %v229
      %v699 = vpop.permute.xlu0 %698
      %700 = vset.pattern.permute.xlu0 0
      %701 = vperm.xlu0 %700, %v230
      %v702 = vpop.permute.xlu0 %701
      %703 = vset.pattern.permute.xlu0 0
      %704 = vperm.xlu0 %703, %v231
      %v705 = vpop.permute.xlu0 %704
      %706 = vset.pattern.permute.xlu0 0
      %707 = vperm.xlu0 %706, %v232
      %v708 = vpop.permute.xlu0 %707
      %709 = vset.pattern.permute.xlu0 0
      %710 = vperm.xlu0 %709, %v233
      %v711 = vpop.permute.xlu0 %710
      %712 = vset.pattern.permute.xlu0 0
      %713 = vperm.xlu0 %712, %v234
      %v714 = vpop.permute.xlu0 %713
      %715 = vset.pattern.permute.xlu0 0
      %716 = vperm.xlu0 %715, %v235
      %v717 = vpop.permute.xlu0 %716
      %718 = vset.pattern.permute.xlu0 0
      %719 = vperm.xlu0 %718, %v236
      %v720 = vpop.permute.xlu0 %719
      %721 = vset.pattern.permute.xlu0 0
      %722 = vperm.xlu0 %721, %v237
      %v723 = vpop.permute.xlu0 %722
      %724 = vset.pattern.permute.xlu0 0
      %725 = vperm.xlu0 %724, %v238
      %v726 = vpop.permute.xlu0 %725
      %727 = vset.pattern.permute.xlu0 0
      %728 = vperm.xlu0 %727, %v239
      %v729 = vpop.permute.xlu0 %728
      %730 = vset.pattern.permute.xlu0 0
      %731 = vperm.xlu0 %730, %v240
      %v732 = vpop.permute.xlu0 %731
      %733 = vset.pattern.permute.xlu0 0
      %734 = vperm.xlu0 %733, %v241
      %v735 = vpop.permute.xlu0 %734
      %736 = vset.pattern.permute.xlu0 0
      %737 = vperm.xlu0 %736, %v242
      %v738 = vpop.permute.xlu0 %737
      %739 = vset.pattern.permute.xlu0 0
      %740 = vperm.xlu0 %739, %v243
      %v741 = vpop.permute.xlu0 %740
      %742 = vset.pattern.permute.xlu0 0
      %743 = vperm.xlu0 %742, %v244
      %v744 = vpop.permute.xlu0 %743
      %745 = vset.pattern.permute.xlu0 0
      %746 = vperm.xlu0 %745, %v245
      %v747 = vpop.permute.xlu0 %746
      %748 = vset.pattern.permute.xlu0 0
      %749 = vperm.xlu0 %748, %v246
      %v750 = vpop.permute.xlu0 %749
      %751 = vset.pattern.permute.xlu0 0
      %752 = vperm.xlu0 %751, %v247
      %v753 = vpop.permute.xlu0 %752
      %754 = vset.pattern.permute.xlu0 0
      %755 = vperm.xlu0 %754, %v248
      %v756 = vpop.permute.xlu0 %755
      %757 = vset.pattern.permute.xlu0 0
      %758 = vperm.xlu0 %757, %v249
      %v759 = vpop.permute.xlu0 %758
      %760 = vset.pattern.permute.xlu0 0
      %761 = vperm.xlu0 %760, %v250
      %v762 = vpop.permute.xlu0 %761
      %v763 = vlaneseq
      %v764 = vand.u32 %v763, 127
      %v765 = vperm.slane %v381, %v764
      %v766 = vadd.s32 %v764, 4294967288
      %v767 = vperm.slane %v384, %v766
      %vm768 = vcmask 130112
      %v769 = vsel %vm768, %v767, %v765
      %v770 = vadd.s32 %v764, 4294967280
      %v771 = vperm.slane %v387, %v770
      %vm772 = vcmask 195712
      %v773 = vsel %vm772, %v771, %v769
      %v774 = vadd.s32 %v764, 4294967272
      %v775 = vperm.slane %v390, %v774
      %vm776 = vcmask 261312
      %v777 = vsel %vm776, %v775, %v773
      %v778 = vadd.s32 %v764, 4294967264
      %v779 = vperm.slane %v393, %v778
      %vm780 = vcmask 326912
      %v781 = vsel %vm780, %v779, %v777
      %v782 = vadd.s32 %v764, 4294967256
      %v783 = vperm.slane %v396, %v782
      %vm784 = vcmask 392512
      %v785 = vsel %vm784, %v783, %v781
      %v786 = vadd.s32 %v764, 4294967248
      %v787 = vperm.slane %v399, %v786
      %vm788 = vcmask 458112
      %v789 = vsel %vm788, %v787, %v785
      %v790 = vadd.s32 %v764, 4294967240
      %v791 = vperm.slane %v402, %v790
      %vm792 = vcmask 523712
      %v793 = vsel %vm792, %v791, %v789
      %v794 = vadd.s32 %v764, 4294967232
      %v795 = vperm.slane %v405, %v794
      %vm796 = vcmask 589312
      %v797 = vsel %vm796, %v795, %v793
      %v798 = vadd.s32 %v764, 4294967224
      %v799 = vperm.slane %v408, %v798
      %vm800 = vcmask 654912
      %v801 = vsel %vm800, %v799, %v797
      %v802 = vadd.s32 %v764, 4294967216
      %v803 = vperm.slane %v411, %v802
      %vm804 = vcmask 720512
      %v805 = vsel %vm804, %v803, %v801
      %v806 = vadd.s32 %v764, 4294967208
      %v807 = vperm.slane %v414, %v806
      %vm808 = vcmask 786112
      %v809 = vsel %vm808, %v807, %v805
      %v810 = vadd.s32 %v764, 4294967200
      %v811 = vperm.slane %v417, %v810
      %vm812 = vcmask 851712
      %v813 = vsel %vm812, %v811, %v809
      %v814 = vadd.s32 %v764, 4294967192
      %v815 = vperm.slane %v420, %v814
      %vm816 = vcmask 917312
      %v817 = vsel %vm816, %v815, %v813
      %v818 = vadd.s32 %v764, 4294967184
      %v819 = vperm.slane %v423, %v818
      %vm820 = vcmask 982912
      %v821 = vsel %vm820, %v819, %v817
      %v822 = vadd.s32 %v764, 4294967176
      %v823 = vperm.slane %v426, %v822
      %vm824 = vcmask 1048512
      %v825 = vsel %vm824, %v823, %v821
      %v826 = vperm.slane %v429, %v764
      %v827 = vperm.slane %v432, %v766
      %v828 = vsel %vm768, %v827, %v826
      %v829 = vperm.slane %v435, %v770
      %v830 = vsel %vm772, %v829, %v828
      %v831 = vperm.slane %v438, %v774
      %v832 = vsel %vm776, %v831, %v830
      %v833 = vperm.slane %v441, %v778
      %v834 = vsel %vm780, %v833, %v832
      %v835 = vperm.slane %v444, %v782
      %v836 = vsel %vm784, %v835, %v834
      %v837 = vperm.slane %v447, %v786
      %v838 = vsel %vm788, %v837, %v836
      %v839 = vperm.slane %v450, %v790
      %v840 = vsel %vm792, %v839, %v838
      %v841 = vperm.slane %v453, %v794
      %v842 = vsel %vm796, %v841, %v840
      %v843 = vperm.slane %v456, %v798
      %v844 = vsel %vm800, %v843, %v842
      %v845 = vperm.slane %v459, %v802
      %v846 = vsel %vm804, %v845, %v844
      %v847 = vperm.slane %v462, %v806
      %v848 = vsel %vm808, %v847, %v846
      %v849 = vperm.slane %v465, %v810
      %v850 = vsel %vm812, %v849, %v848
      %v851 = vperm.slane %v468, %v814
      %v852 = vsel %vm816, %v851, %v850
      %v853 = vperm.slane %v471, %v818
      %v854 = vsel %vm820, %v853, %v852
      %v855 = vperm.slane %v474, %v822
      %v856 = vsel %vm824, %v855, %v854
      %v857 = vperm.slane %v477, %v764
      %v858 = vperm.slane %v480, %v766
      %v859 = vsel %vm768, %v858, %v857
      %v860 = vperm.slane %v483, %v770
      %v861 = vsel %vm772, %v860, %v859
      %v862 = vperm.slane %v486, %v774
      %v863 = vsel %vm776, %v862, %v861
      %v864 = vperm.slane %v489, %v778
      %v865 = vsel %vm780, %v864, %v863
      %v866 = vperm.slane %v492, %v782
      %v867 = vsel %vm784, %v866, %v865
      %v868 = vperm.slane %v495, %v786
      %v869 = vsel %vm788, %v868, %v867
      %v870 = vperm.slane %v498, %v790
      %v871 = vsel %vm792, %v870, %v869
      %v872 = vperm.slane %v501, %v794
      %v873 = vsel %vm796, %v872, %v871
      %v874 = vperm.slane %v504, %v798
      %v875 = vsel %vm800, %v874, %v873
      %v876 = vperm.slane %v507, %v802
      %v877 = vsel %vm804, %v876, %v875
      %v878 = vperm.slane %v510, %v806
      %v879 = vsel %vm808, %v878, %v877
      %v880 = vperm.slane %v513, %v810
      %v881 = vsel %vm812, %v880, %v879
      %v882 = vperm.slane %v516, %v814
      %v883 = vsel %vm816, %v882, %v881
      %v884 = vperm.slane %v519, %v818
      %v885 = vsel %vm820, %v884, %v883
      %v886 = vperm.slane %v522, %v822
      %v887 = vsel %vm824, %v886, %v885
      %v888 = vperm.slane %v525, %v764
      %v889 = vperm.slane %v528, %v766
      %v890 = vsel %vm768, %v889, %v888
      %v891 = vperm.slane %v531, %v770
      %v892 = vsel %vm772, %v891, %v890
      %v893 = vperm.slane %v534, %v774
      %v894 = vsel %vm776, %v893, %v892
      %v895 = vperm.slane %v537, %v778
      %v896 = vsel %vm780, %v895, %v894
      %v897 = vperm.slane %v540, %v782
      %v898 = vsel %vm784, %v897, %v896
      %v899 = vperm.slane %v543, %v786
      %v900 = vsel %vm788, %v899, %v898
      %v901 = vperm.slane %v546, %v790
      %v902 = vsel %vm792, %v901, %v900
      %v903 = vperm.slane %v549, %v794
      %v904 = vsel %vm796, %v903, %v902
      %v905 = vperm.slane %v552, %v798
      %v906 = vsel %vm800, %v905, %v904
      %v907 = vperm.slane %v555, %v802
      %v908 = vsel %vm804, %v907, %v906
      %v909 = vperm.slane %v558, %v806
      %v910 = vsel %vm808, %v909, %v908
      %v911 = vperm.slane %v561, %v810
      %v912 = vsel %vm812, %v911, %v910
      %v913 = vperm.slane %v564, %v814
      %v914 = vsel %vm816, %v913, %v912
      %v915 = vperm.slane %v567, %v818
      %v916 = vsel %vm820, %v915, %v914
      %v917 = vperm.slane %v570, %v822
      %v918 = vsel %vm824, %v917, %v916
      %v919 = vperm.slane %v573, %v764
      %v920 = vperm.slane %v576, %v766
      %v921 = vsel %vm768, %v920, %v919
      %v922 = vperm.slane %v579, %v770
      %v923 = vsel %vm772, %v922, %v921
      %v924 = vperm.slane %v582, %v774
      %v925 = vsel %vm776, %v924, %v923
      %v926 = vperm.slane %v585, %v778
      %v927 = vsel %vm780, %v926, %v925
      %v928 = vperm.slane %v588, %v782
      %v929 = vsel %vm784, %v928, %v927
      %v930 = vperm.slane %v591, %v786
      %v931 = vsel %vm788, %v930, %v929
      %v932 = vperm.slane %v594, %v790
      %v933 = vsel %vm792, %v932, %v931
      %v934 = vperm.slane %v597, %v794
      %v935 = vsel %vm796, %v934, %v933
      %v936 = vperm.slane %v600, %v798
      %v937 = vsel %vm800, %v936, %v935
      %v938 = vperm.slane %v603, %v802
      %v939 = vsel %vm804, %v938, %v937
      %v940 = vperm.slane %v606, %v806
      %v941 = vsel %vm808, %v940, %v939
      %v942 = vperm.slane %v609, %v810
      %v943 = vsel %vm812, %v942, %v941
      %v944 = vperm.slane %v612, %v814
      %v945 = vsel %vm816, %v944, %v943
      %v946 = vperm.slane %v615, %v818
      %v947 = vsel %vm820, %v946, %v945
      %v948 = vperm.slane %v618, %v822
      %v949 = vsel %vm824, %v948, %v947
      %v950 = vperm.slane %v621, %v764
      %v951 = vperm.slane %v624, %v766
      %v952 = vsel %vm768, %v951, %v950
      %v953 = vperm.slane %v627, %v770
      %v954 = vsel %vm772, %v953, %v952
      %v955 = vperm.slane %v630, %v774
      %v956 = vsel %vm776, %v955, %v954
      %v957 = vperm.slane %v633, %v778
      %v958 = vsel %vm780, %v957, %v956
      %v959 = vperm.slane %v636, %v782
      %v960 = vsel %vm784, %v959, %v958
      %v961 = vperm.slane %v639, %v786
      %v962 = vsel %vm788, %v961, %v960
      %v963 = vperm.slane %v642, %v790
      %v964 = vsel %vm792, %v963, %v962
      %v965 = vperm.slane %v645, %v794
      %v966 = vsel %vm796, %v965, %v964
      %v967 = vperm.slane %v648, %v798
      %v968 = vsel %vm800, %v967, %v966
      %v969 = vperm.slane %v651, %v802
      %v970 = vsel %vm804, %v969, %v968
      %v971 = vperm.slane %v654, %v806
      %v972 = vsel %vm808, %v971, %v970
      %v973 = vperm.slane %v657, %v810
      %v974 = vsel %vm812, %v973, %v972
      %v975 = vperm.slane %v660, %v814
      %v976 = vsel %vm816, %v975, %v974
      %v977 = vperm.slane %v663, %v818
      %v978 = vsel %vm820, %v977, %v976
      %v979 = vperm.slane %v666, %v822
      %v980 = vsel %vm824, %v979, %v978
      %v981 = vperm.slane %v669, %v764
      %v982 = vperm.slane %v672, %v766
      %v983 = vsel %vm768, %v982, %v981
      %v984 = vperm.slane %v675, %v770
      %v985 = vsel %vm772, %v984, %v983
      %v986 = vperm.slane %v678, %v774
      %v987 = vsel %vm776, %v986, %v985
      %v988 = vperm.slane %v681, %v778
      %v989 = vsel %vm780, %v988, %v987
      %v990 = vperm.slane %v684, %v782
      %v991 = vsel %vm784, %v990, %v989
      %v992 = vperm.slane %v687, %v786
      %v993 = vsel %vm788, %v992, %v991
      %v994 = vperm.slane %v690, %v790
      %v995 = vsel %vm792, %v994, %v993
      %v996 = vperm.slane %v693, %v794
      %v997 = vsel %vm796, %v996, %v995
      %v998 = vperm.slane %v696, %v798
      %v999 = vsel %vm800, %v998, %v997
      %v1000 = vperm.slane %v699, %v802
      %v1001 = vsel %vm804, %v1000, %v999
      %v1002 = vperm.slane %v702, %v806
      %v1003 = vsel %vm808, %v1002, %v1001
      %v1004 = vperm.slane %v705, %v810
      %v1005 = vsel %vm812, %v1004, %v1003
      %v1006 = vperm.slane %v708, %v814
      %v1007 = vsel %vm816, %v1006, %v1005
      %v1008 = vperm.slane %v711, %v818
      %v1009 = vsel %vm820, %v1008, %v1007
      %v1010 = vperm.slane %v714, %v822
      %v1011 = vsel %vm824, %v1010, %v1009
      %v1012 = vperm.slane %v717, %v764
      %v1013 = vperm.slane %v720, %v766
      %v1014 = vsel %vm768, %v1013, %v1012
      %v1015 = vperm.slane %v723, %v770
      %v1016 = vsel %vm772, %v1015, %v1014
      %v1017 = vperm.slane %v726, %v774
      %v1018 = vsel %vm776, %v1017, %v1016
      %v1019 = vperm.slane %v729, %v778
      %v1020 = vsel %vm780, %v1019, %v1018
      %v1021 = vperm.slane %v732, %v782
      %v1022 = vsel %vm784, %v1021, %v1020
      %v1023 = vperm.slane %v735, %v786
      %v1024 = vsel %vm788, %v1023, %v1022
      %v1025 = vperm.slane %v738, %v790
      %v1026 = vsel %vm792, %v1025, %v1024
      %v1027 = vperm.slane %v741, %v794
      %v1028 = vsel %vm796, %v1027, %v1026
      %v1029 = vperm.slane %v744, %v798
      %v1030 = vsel %vm800, %v1029, %v1028
      %v1031 = vperm.slane %v747, %v802
      %v1032 = vsel %vm804, %v1031, %v1030
      %v1033 = vperm.slane %v750, %v806
      %v1034 = vsel %vm808, %v1033, %v1032
      %v1035 = vperm.slane %v753, %v810
      %v1036 = vsel %vm812, %v1035, %v1034
      %v1037 = vperm.slane %v756, %v814
      %v1038 = vsel %vm816, %v1037, %v1036
      %v1039 = vperm.slane %v759, %v818
      %v1040 = vsel %vm820, %v1039, %v1038
      %v1041 = vperm.slane %v762, %v822
      %v1042 = vsel %vm824, %v1041, %v1040
      %vm1043 = vcmask 1041409
      %v1044 = vsel %vm1043, %v856, %v825
      %vm1045 = vcmask 1042434
      %v1046 = vsel %vm1045, %v887, %v1044
      %vm1047 = vcmask 1043459
      %v1048 = vsel %vm1047, %v918, %v1046
      %vm1049 = vcmask 1044484
      %v1050 = vsel %vm1049, %v949, %v1048
      %vm1051 = vcmask 1045509
      %v1052 = vsel %vm1051, %v980, %v1050
      %vm1053 = vcmask 1046534
      %v1054 = vsel %vm1053, %v1011, %v1052
      %vm1055 = vcmask 1047559
      %v1056 = vsel %vm1055, %v1042, %v1054
      %1058 = vmin.xlane.f32.xlu0 %v1056
      %v1059 = vpop.xlane.xlu0 %1058
      %1060 = vmax.xlane.f32.xlu0 %v1056
      %v1061 = vpop.xlane.xlu0 %1060
      %v1062 = vsub.f32 %v1061, %v1059
      %v1063 = vmul.f32 %v1062, 0.14285715
      %v1064 = vmul.f32 %v1063, 0.0
      %v1065 = vadd.f32 %v1059, %v1064
      %v1066 = vadd.f32 %v1065, 100.0
      %v1067 = vmin.f32 %v1066, %v1061
      %vm1068 = vcmp.le.f32.partialorder %v1065, %v1056
      %vm1069 = vcmp.ge.f32.partialorder %v1067, %v1056
      %vm1070 = vmand %vm1068, %vm1069
      %v1071 = vsel %vm1070, 1, 0
      %v1072 = vrot.slane %v1071, 1
      %v1073 = vrot.slane %v1071, 2
      %v1074 = vrot.slane %v1071, 3
      %v1075 = vrot.slane %v1071, 4
      %v1076 = vrot.slane %v1071, 5
      %v1077 = vrot.slane %v1071, 6
      %v1078 = vrot.slane %v1071, 7
      %1079 = vst [vmem:[%s121] sm:$0x1] %v1071
      %1080 = vst [vmem:[%s121 + $0x8] sm:$0x1] %v1072
      %1081 = vst [vmem:[%s121 + $0x10] sm:$0x1] %v1073
      %1082 = vst [vmem:[%s121 + $0x18] sm:$0x1] %v1074
      %1083 = vst [vmem:[%s121 + $0x20] sm:$0x1] %v1075
      %1084 = vst [vmem:[%s121 + $0x28] sm:$0x1] %v1076
      %1085 = vst [vmem:[%s121 + $0x30] sm:$0x1] %v1077
      %1086 = vst [vmem:[%s121 + $0x38] sm:$0x1] %v1078
      %v1087 = vadd.f32 %v1059, %v1063
      %v1088 = vadd.f32 %v1087, 100.0
      %v1089 = vmin.f32 %v1088, %v1061
      %vm1090 = vcmp.le.f32.partialorder %v1087, %v1056
      %vm1091 = vcmp.ge.f32.partialorder %v1089, %v1056
      %vm1092 = vmand %vm1090, %vm1091
      %v1093 = vsel %vm1092, 1, 0
      %v1094 = vrot.slane %v1093, 1
      %v1095 = vrot.slane %v1093, 2
      %v1096 = vrot.slane %v1093, 3
      %v1097 = vrot.slane %v1093, 4
      %v1098 = vrot.slane %v1093, 5
      %v1099 = vrot.slane %v1093, 6
      %v1100 = vrot.slane %v1093, 7
      %1101 = vst [vmem:[%s121 + $0x1] sm:$0x1] %v1093
      %1102 = vst [vmem:[%s121 + $0x9] sm:$0x1] %v1094
      %1103 = vst [vmem:[%s121 + $0x11] sm:$0x1] %v1095
      %1104 = vst [vmem:[%s121 + $0x19] sm:$0x1] %v1096
      %1105 = vst [vmem:[%s121 + $0x21] sm:$0x1] %v1097
      %1106 = vst [vmem:[%s121 + $0x29] sm:$0x1] %v1098
      %1107 = vst [vmem:[%s121 + $0x31] sm:$0x1] %v1099
      %1108 = vst [vmem:[%s121 + $0x39] sm:$0x1] %v1100
      %v1109 = vmul.f32 %v1063, 2.0
      %v1110 = vadd.f32 %v1059, %v1109
      %v1111 = vadd.f32 %v1110, 100.0
      %v1112 = vmin.f32 %v1111, %v1061
      %vm1113 = vcmp.le.f32.partialorder %v1110, %v1056
      %vm1114 = vcmp.ge.f32.partialorder %v1112, %v1056
      %vm1115 = vmand %vm1113, %vm1114
      %v1116 = vsel %vm1115, 1, 0
      %v1117 = vrot.slane %v1116, 1
      %v1118 = vrot.slane %v1116, 2
      %v1119 = vrot.slane %v1116, 3
      %v1120 = vrot.slane %v1116, 4
      %v1121 = vrot.slane %v1116, 5
      %v1122 = vrot.slane %v1116, 6
      %v1123 = vrot.slane %v1116, 7
      %1124 = vst [vmem:[%s121 + $0x2] sm:$0x1] %v1116
      %1125 = vst [vmem:[%s121 + $0xa] sm:$0x1] %v1117
      %1126 = vst [vmem:[%s121 + $0x12] sm:$0x1] %v1118
      %1127 = vst [vmem:[%s121 + $0x1a] sm:$0x1] %v1119
      %1128 = vst [vmem:[%s121 + $0x22] sm:$0x1] %v1120
      %1129 = vst [vmem:[%s121 + $0x2a] sm:$0x1] %v1121
      %1130 = vst [vmem:[%s121 + $0x32] sm:$0x1] %v1122
      %1131 = vst [vmem:[%s121 + $0x3a] sm:$0x1] %v1123
      %v1132 = vmul.f32 %v1063, 3.0
      %v1133 = vadd.f32 %v1059, %v1132
      %v1134 = vadd.f32 %v1133, 100.0
      %v1135 = vmin.f32 %v1134, %v1061
      %vm1136 = vcmp.le.f32.partialorder %v1133, %v1056
      %vm1137 = vcmp.ge.f32.partialorder %v1135, %v1056
      %vm1138 = vmand %vm1136, %vm1137
      %v1139 = vsel %vm1138, 1, 0
      %v1140 = vrot.slane %v1139, 1
      %v1141 = vrot.slane %v1139, 2
      %v1142 = vrot.slane %v1139, 3
      %v1143 = vrot.slane %v1139, 4
      %v1144 = vrot.slane %v1139, 5
      %v1145 = vrot.slane %v1139, 6
      %v1146 = vrot.slane %v1139, 7
      %1147 = vst [vmem:[%s121 + $0x3] sm:$0x1] %v1139
      %1148 = vst [vmem:[%s121 + $0xb] sm:$0x1] %v1140
      %1149 = vst [vmem:[%s121 + $0x13] sm:$0x1] %v1141
      %1150 = vst [vmem:[%s121 + $0x1b] sm:$0x1] %v1142
      %1151 = vst [vmem:[%s121 + $0x23] sm:$0x1] %v1143
      %1152 = vst [vmem:[%s121 + $0x2b] sm:$0x1] %v1144
      %1153 = vst [vmem:[%s121 + $0x33] sm:$0x1] %v1145
      %1154 = vst [vmem:[%s121 + $0x3b] sm:$0x1] %v1146
      %v1155 = vmul.f32 %v1063, 4.0
      %v1156 = vadd.f32 %v1059, %v1155
      %v1157 = vadd.f32 %v1156, 100.0
      %v1158 = vmin.f32 %v1157, %v1061
      %vm1159 = vcmp.le.f32.partialorder %v1156, %v1056
      %vm1160 = vcmp.ge.f32.partialorder %v1158, %v1056
      %vm1161 = vmand %vm1159, %vm1160
      %v1162 = vsel %vm1161, 1, 0
      %v1163 = vrot.slane %v1162, 1
      %v1164 = vrot.slane %v1162, 2
      %v1165 = vrot.slane %v1162, 3
      %v1166 = vrot.slane %v1162, 4
      %v1167 = vrot.slane %v1162, 5
      %v1168 = vrot.slane %v1162, 6
      %v1169 = vrot.slane %v1162, 7
      %1170 = vst [vmem:[%s121 + $0x4] sm:$0x1] %v1162
      %1171 = vst [vmem:[%s121 + $0xc] sm:$0x1] %v1163
      %1172 = vst [vmem:[%s121 + $0x14] sm:$0x1] %v1164
      %1173 = vst [vmem:[%s121 + $0x1c] sm:$0x1] %v1165
      %1174 = vst [vmem:[%s121 + $0x24] sm:$0x1] %v1166
      %1175 = vst [vmem:[%s121 + $0x2c] sm:$0x1] %v1167
      %1176 = vst [vmem:[%s121 + $0x34] sm:$0x1] %v1168
      %1177 = vst [vmem:[%s121 + $0x3c] sm:$0x1] %v1169
      %v1178 = vmul.f32 %v1063, 5.0
      %v1179 = vadd.f32 %v1059, %v1178
      %v1180 = vadd.f32 %v1179, 100.0
      %v1181 = vmin.f32 %v1180, %v1061
      %vm1182 = vcmp.le.f32.partialorder %v1179, %v1056
      %vm1183 = vcmp.ge.f32.partialorder %v1181, %v1056
      %vm1184 = vmand %vm1182, %vm1183
      %v1185 = vsel %vm1184, 1, 0
      %v1186 = vrot.slane %v1185, 1
      %v1187 = vrot.slane %v1185, 2
      %v1188 = vrot.slane %v1185, 3
      %v1189 = vrot.slane %v1185, 4
      %v1190 = vrot.slane %v1185, 5
      %v1191 = vrot.slane %v1185, 6
      %v1192 = vrot.slane %v1185, 7
      %1193 = vst [vmem:[%s121 + $0x5] sm:$0x1] %v1185
      %1194 = vst [vmem:[%s121 + $0xd] sm:$0x1] %v1186
      %1195 = vst [vmem:[%s121 + $0x15] sm:$0x1] %v1187
      %1196 = vst [vmem:[%s121 + $0x1d] sm:$0x1] %v1188
      %1197 = vst [vmem:[%s121 + $0x25] sm:$0x1] %v1189
      %1198 = vst [vmem:[%s121 + $0x2d] sm:$0x1] %v1190
      %1199 = vst [vmem:[%s121 + $0x35] sm:$0x1] %v1191
      %1200 = vst [vmem:[%s121 + $0x3d] sm:$0x1] %v1192
      %v1201 = vmul.f32 %v1063, 6.0
      %v1202 = vadd.f32 %v1059, %v1201
      %v1203 = vadd.f32 %v1202, 100.0
      %v1204 = vmin.f32 %v1203, %v1061
      %vm1205 = vcmp.le.f32.partialorder %v1202, %v1056
      %vm1206 = vcmp.ge.f32.partialorder %v1204, %v1056
      %vm1207 = vmand %vm1205, %vm1206
      %v1208 = vsel %vm1207, 1, 0
      %v1209 = vrot.slane %v1208, 1
      %v1210 = vrot.slane %v1208, 2
      %v1211 = vrot.slane %v1208, 3
      %v1212 = vrot.slane %v1208, 4
      %v1213 = vrot.slane %v1208, 5
      %v1214 = vrot.slane %v1208, 6
      %v1215 = vrot.slane %v1208, 7
      %1216 = vst [vmem:[%s121 + $0x6] sm:$0x1] %v1208
      %1217 = vst [vmem:[%s121 + $0xe] sm:$0x1] %v1209
      %1218 = vst [vmem:[%s121 + $0x16] sm:$0x1] %v1210
      %1219 = vst [vmem:[%s121 + $0x1e] sm:$0x1] %v1211
      %1220 = vst [vmem:[%s121 + $0x26] sm:$0x1] %v1212
      %1221 = vst [vmem:[%s121 + $0x2e] sm:$0x1] %v1213
      %1222 = vst [vmem:[%s121 + $0x36] sm:$0x1] %v1214
      %1223 = vst [vmem:[%s121 + $0x3e] sm:$0x1] %v1215
      %s1224 = smul.u32 8, %s12
      %p1225 = scmp.lt.s32.totalorder %s1224, 15
      %s1226 = scalar_select %p1225, %s1224, 15
      %s1227 = smul.addr %s1226, 8
      %s1228 = scalar_lea.vmem %s1, %s1227
      // Predicated region
      $region25: #{tpu_custom_call.1} parent=23 // pred_check
        %p1229 = pneg %p56
      $region26: #{tpu_custom_call.1} parent=23 // pred_check_branch
        %1231 = sbr.rel (%p1229) target = $region28
      $region27: #{tpu_custom_call.1} parent=23 // pred_region
        %s1232 = smul.u32 8, %s12
      $region28: #{tpu_custom_call.1} parent=23 // pred_fallthru
        _
    $region24: #{tpu_custom_call.1} parent=5 // pred_fallthru
      _
    %p1233 = scmp.le.s32.totalorder 2, %s7
    // Predicated region
    $region29: #{tpu_custom_call.1} parent=5 // pred_check
      %p1234 = pneg %p1233
    $region30: #{tpu_custom_call.1} parent=5 // pred_check_branch
      %1236 = sbr.rel (%p1234) target = $region32
    $region31: #{tpu_custom_call.1} parent=5 // pred_region
      %s1237 = ssub.s32 %s7, 2
      // Predicated region
      $region33: #{tpu_custom_call.1} parent=31 // pred_check
        %p1238 = pneg %p62
      $region34: #{tpu_custom_call.1} parent=31 // pred_check_branch
        %1240 = sbr.rel (%p1238) target = $region36
      $region35: #{tpu_custom_call.1} parent=31 // pred_region
        %s1241 = smul.u32 8, %s13
        %p1242 = scmp.lt.s32.totalorder %s1241, 15
        %s1243 = scalar_select %p1242, %s1241, 15
        %s1244 = smul.addr %s1243, 8
        %s1245 = scalar_lea.vmem %s1, %s1244
      $region36: #{tpu_custom_call.1} parent=31 // pred_fallthru
        _
    $region32: #{tpu_custom_call.1} parent=5 // pred_fallthru
      _
  $region6: #{tpu_custom_call.1} parent=0 // loop_footer
    %s11 = sadd.s32 1, %s7
  $region7: #{tpu_custom_call.1} parent=0 // loop_footer_branch
    %6 = sbr.rel target = $region3
  $region8: #{tpu_custom_call.1} parent=0 // loop_exit
    _

</llo_original>
